<compile_context>
chip_gen: v5e
topology: v5e:2x2
jax: 0.10.0
libtpu: 0.0.40
codegen_flags: <defaults>
</compile_context>

<pallas_src>
import math
import functools

import jax
import jax.numpy as jnp
from jax.experimental import pallas as pl
from jax.experimental.pallas import tpu as pltpu

_MASK_VALUE = -1e30   # large finite negative: exp(mask - m) underflows to 0


# ---------------------------------------------------------------------------
# Tiling helpers
# ---------------------------------------------------------------------------
def _pick_block(total, preferred):
    """Largest multiple-of-8 tile <= preferred that divides total (or total)."""
    if total <= preferred:
        return total
    for blk in (1024, 512, 256, 128, 64, 32, 16, 8):
        if blk <= preferred and total % blk == 0:
            return blk
    # TODO(synk): prime/odd extents fall back to the full size (no padding
    #             machinery here); may exceed the VMEM budget for huge T.
    return total


def _pick_lane_block(total, preferred):
    """Lane-dim tile: multiple of 128 that divides total, or the full extent."""
    if total <= preferred:
        return total
    for blk in (2048, 1024, 512, 384, 256, 128):
        if blk <= preferred and total % blk == 0:
            return blk
    return total


def _vmem_limit_bytes(frac=0.75):
    """Re-derive the VMEM budget from the chip instead of hard-coding 32 MiB."""
    try:
        cap = pltpu.get_tpu_info().vmem_capacity_bytes
        return int(cap * frac)
    except Exception:
        return None   # fall back to the compiler default


# ---------------------------------------------------------------------------
# Fused linear kernel: y = x @ W + b, tiled over (rows, output columns)
# ---------------------------------------------------------------------------
def _linear_kernel(x_ref, w_ref, b_ref, o_ref):
    acc = jnp.dot(x_ref[...], w_ref[...], preferred_element_type=jnp.float32)
    o_ref[...] = (acc + b_ref[...]).astype(o_ref.dtype)


def _linear(x2d, w, b, *, out_dtype, compute_dtype,
            block_rows=256, block_cols=512, vmem_limit=None):
    R, Cin = x2d.shape
    Cout = w.shape[1]
    blk_r = _pick_block(R, block_rows)
    blk_c = _pick_lane_block(Cout, block_cols)
    return pl.pallas_call(
        _linear_kernel,
        out_shape=jax.ShapeDtypeStruct((R, Cout), out_dtype),
        grid_spec=pltpu.PrefetchScalarGridSpec(
            num_scalar_prefetch=0,
            grid=(R // blk_r, Cout // blk_c),
            in_specs=[
                pl.BlockSpec((blk_r, Cin), lambda r, c: (r, 0)),
                pl.BlockSpec((Cin, blk_c), lambda r, c: (0, c)),
                pl.BlockSpec((1, blk_c), lambda r, c: (0, c)),
            ],
            out_specs=pl.BlockSpec((blk_r, blk_c), lambda r, c: (r, c)),
        ),
        compiler_params=pltpu.CompilerParams(
            dimension_semantics=("parallel", "parallel"),
            vmem_limit_bytes=vmem_limit,
        ),
    )(x2d.astype(compute_dtype), w.astype(compute_dtype),
      b.astype(jnp.float32))


# ---------------------------------------------------------------------------
# Flash-attention core over head-major (B*H, T, D) pre-projected Q/K/V
# ---------------------------------------------------------------------------
def _flash_kernel(q_ref, k_ref, v_ref, o_ref, m_scr, l_scr, acc_scr,
                  *, compute_dtype, exact_recip):
    blk_q = q_ref.shape[1]
    blk_kv = k_ref.shape[1]

    qi = pl.program_id(1)
    ki = pl.program_id(2)
    n_kv = pl.num_programs(2)
    q_start = qi * blk_q          # absolute position of first query row
    k_start = ki * blk_kv         # absolute position of first key row

    @pl.when(ki == 0)
    def _init():
        m_scr[...] = jnp.full_like(m_scr, _MASK_VALUE)
        l_scr[...] = jnp.zeros_like(l_scr)
        acc_scr[...] = jnp.zeros_like(acc_scr)

    def _accumulate(s):
        # Online softmax with lane-dense (..., 128) running max / denominator.
        m_prev = m_scr[...]
        m_next = jnp.maximum(m_prev, jnp.max(s, axis=-1, keepdims=True))
        alpha = jnp.exp(m_prev - m_next)
        p = jnp.exp(s - m_next[..., :1])                       # (G,Tq,Tkv) f32
        l_scr[...] = alpha * l_scr[...] + jnp.sum(p, axis=-1, keepdims=True)
        acc_scr[...] = alpha[..., :1] * acc_scr[...] + jnp.einsum(
            "gts,gsd->gtd", p.astype(compute_dtype), v_ref[...],
            preferred_element_type=jnp.float32)
        m_scr[...] = m_next

    # Only KV blocks at/below the causal diagonal do work.  (Their DMAs are
    # also suppressed for skipped blocks via the clamped k/v index maps.)
    @pl.when(k_start <= q_start + blk_q - 1)
    def _update():
        # Head-batched scores; Q arrives pre-scaled by 1/sqrt(D).
        s = jnp.einsum("gtd,gsd->gts", q_ref[...], k_ref[...],
                       preferred_element_type=jnp.float32)
        straddles = k_start + blk_kv - 1 > q_start   # tile touches the diagonal

        @pl.when(straddles)
        def _masked():
            rows = q_start + jax.lax.broadcasted_iota(
                jnp.int32, (blk_q, blk_kv), 0)
            cols = k_start + jax.lax.broadcasted_iota(
                jnp.int32, (blk_q, blk_kv), 1)
            _accumulate(jnp.where((rows >= cols)[None, :, :], s, _MASK_VALUE))

        @pl.when(jnp.logical_not(straddles))
        def _unmasked():
            _accumulate(s)

    @pl.when(ki == n_kv - 1)
    def _finalize():
        inv_l = pl.reciprocal(l_scr[..., :1], approx=not exact_recip)
        o_ref[...] = (acc_scr[...] * inv_l).astype(o_ref.dtype)


# ---------------------------------------------------------------------------
# Full module forward
# ---------------------------------------------------------------------------
def masked_causal_attention(x, params, n_heads, *,
                            block_q=256, block_kv=512,
                            compute_dtype=jnp.bfloat16):
    """x: [B, T, C]; params: dict of (C, C) weights and (1, C) biases."""
    B, T, C = x.shape
    assert C % n_heads == 0, "h_dim must be divisible by n_heads"
    H = n_heads
    D = C // H
    scale = 1.0 / math.sqrt(D)

    blk_q = _pick_block(T, block_q)
    blk_kv = _pick_block(T, block_kv)
    n_q = T // blk_q
    n_kv = T // blk_kv

    vmem_limit = _vmem_limit_bytes()
    cd = compute_dtype
    exact = jnp.dtype(cd) == jnp.float32

    # ---- Fused QKV projection, hoisted out of the attention loop. ----------
    # 1/sqrt(D) is folded into the Q weights/bias so the kernel never rescales.
    w_qkv = jnp.concatenate(
        [params["wq"] * scale, params["wk"], params["wv"]], axis=1)
    b_qkv = jnp.concatenate(
        [params["bq"] * scale, params["bk"], params["bv"]], axis=1)
    qkv = _linear(x.reshape(B * T, C), w_qkv, b_qkv,
                  out_dtype=cd, compute_dtype=cd, vmem_limit=vmem_limit)

    def to_head_major(y2d):          # (B*T, C) slice -> (B*H, T, D)
        return (y2d.reshape(B, T, H, D).transpose(0, 2, 1, 3)
                .reshape(B * H, T, D))

    q = to_head_major(qkv[:, :C])
    k = to_head_major(qkv[:, C:2 * C])
    v = to_head_major(qkv[:, 2 * C:])

    # ---- Flash-attention core over head-major (B*H, T, D). -----------------
    BH = B * H
    target_g = max(1, 128 // blk_q)          # pack rows when query tiles small
    blk_g = 1
    for cand in range(min(BH, target_g), 0, -1):
        if BH % cand == 0:
            blk_g = cand
            break
    n_g = BH // blk_g
    # v7x has two TensorCores: keep >= 2 iterations on the parallel axes.
    if n_g * n_q < 2 and blk_g > 1:
        for cand in range(blk_g - 1, 0, -1):
            if BH % cand == 0:
                blk_g = cand
                break
        n_g = BH // blk_g

    kernel = functools.partial(_flash_kernel, compute_dtype=cd,
                               exact_recip=exact)

    def kv_index_map(g, qi, ki):
        # Clamp to the last causally-needed KV block so skipped (above-
        # diagonal) steps repeat the previous block index -> no new DMA.
        last_needed = ((qi + 1) * blk_q - 1) // blk_kv
        return (g, jnp.minimum(ki, last_needed), 0)

    attn = pl.pallas_call(
        kernel,
        out_shape=jax.ShapeDtypeStruct((BH, T, D), cd),
        grid_spec=pltpu.PrefetchScalarGridSpec(
            num_scalar_prefetch=0,
            grid=(n_g, n_q, n_kv),
            in_specs=[
                pl.BlockSpec((blk_g, blk_q, D), lambda g, qi, ki: (g, qi, 0)),
                pl.BlockSpec((blk_g, blk_kv, D), kv_index_map),
                pl.BlockSpec((blk_g, blk_kv, D), kv_index_map),
            ],
            out_specs=pl.BlockSpec((blk_g, blk_q, D),
                                   lambda g, qi, ki: (g, qi, 0)),
            scratch_shapes=[
                pltpu.VMEM((blk_g, blk_q, 128), jnp.float32),  # running max
                pltpu.VMEM((blk_g, blk_q, 128), jnp.float32),  # running denom
                pltpu.VMEM((blk_g, blk_q, D), jnp.float32),    # unnorm. output
            ],
        ),
        compiler_params=pltpu.CompilerParams(
            dimension_semantics=("parallel", "parallel", "arbitrary"),
            vmem_limit_bytes=vmem_limit,
        ),
    )(q, k, v)

    # ---- Head concat (pure layout) + output projection. --------------------
    attn2d = (attn.reshape(B, H, T, D).transpose(0, 2, 1, 3)
              .reshape(B * T, C))
    out2d = _linear(attn2d, params["wp"], params["bp"],
                    out_dtype=x.dtype, compute_dtype=cd,
                    vmem_limit=vmem_limit)
    return out2d.reshape(B, T, C)


# ---------------------------------------------------------------------------
# Pure-JAX reference matching the PyTorch forward (eval mode)
# ---------------------------------------------------------------------------
def _reference(x, params, n_heads):
    B, T, C = x.shape
    D = C // n_heads
    q = x @ params["wq"] + params["bq"]
    k = x @ params["wk"] + params["bk"]
    v = x @ params["wv"] + params["bv"]
    q = q.reshape(B, T, n_heads, D).transpose(0, 2, 1, 3)
    k = k.reshape(B, T, n_heads, D).transpose(0, 2, 1, 3)
    v = v.reshape(B, T, n_heads, D).transpose(0, 2, 1, 3)
    w = jnp.einsum("bhqd,bhkd->bhqk", q, k) / math.sqrt(D)
    mask = jnp.tril(jnp.ones((T, T), dtype=bool))
    w = jnp.where(mask[None, None], w, -jnp.inf)
    w = jax.nn.softmax(w, axis=-1)
    att = jnp.einsum("bhqk,bhkd->bhqd", w, v)
    att = att.transpose(0, 2, 1, 3).reshape(B, T, C)
    return att @ params["wp"] + params["bp"]


if __name__ == "__main__":
    # Small shapes consistent with the module: B=2, T=8, h_dim=32, n_heads=4.
    B, T, C, n_heads = 2, 8, 32, 4
    max_T = 16   # module stores a (max_T, max_T) mask; kernel derives it, T <= max_T
    assert T <= max_T

    key = jax.random.PRNGKey(0)
    keys = jax.random.split(key, 9)
    w_scale = 1.0 / math.sqrt(C)

    params = {
        "wq": jax.random.normal(keys[0], (C, C), jnp.float32) * w_scale,
        "bq": jax.random.normal(keys[1], (1, C), jnp.float32) * 0.1,
        "wk": jax.random.normal(keys[2], (C, C), jnp.float32) * w_scale,
        "bk": jax.random.normal(keys[3], (1, C), jnp.float32) * 0.1,
        "wv": jax.random.normal(keys[4], (C, C), jnp.float32) * w_scale,
        "bv": jax.random.normal(keys[5], (1, C), jnp.float32) * 0.1,
        "wp": jax.random.normal(keys[6], (C, C), jnp.float32) * w_scale,
        "bp": jax.random.normal(keys[7], (1, C), jnp.float32) * 0.1,
    }
    x = jax.random.normal(keys[8], (B, T, C), jnp.float32)

    ref = _reference(x, params, n_heads)

    # Exact-math path (f32 operands, exact reciprocal): validates the
    # hoisted-projection / flash algorithm.
    out_f32 = jax.block_until_ready(
        masked_causal_attention(x, params, n_heads,
                                compute_dtype=jnp.float32))
    assert out_f32.shape == (B, T, C)
    assert jnp.allclose(out_f32, ref, atol=1e-2, rtol=1e-2), \
        "f32 kernel mismatch vs reference"

    # Default fast path: bf16 matmul operands, f32 accumulation/softmax stats.
    out_bf16 = jax.block_until_ready(
        masked_causal_attention(x, params, n_heads))
    rel = jnp.linalg.norm(out_bf16 - ref) / jnp.linalg.norm(ref)
    assert rel < 5e-2, f"bf16 kernel relative error too large: {rel}"

    print("KERNEL_OK")
</pallas_src>

<mosaic_0001>
module attributes {stable_mosaic.version = 11 : i64} {
  func.func @_linear_kernel(%arg0: i32, %arg1: i32, %arg2: memref<16x32xf32, #tpu.memory_space<vmem>>, %arg3: memref<32x96xf32, #tpu.memory_space<vmem>>, %arg4: memref<1x96xf32, #tpu.memory_space<vmem>>, %arg5: memref<16x96xf32, #tpu.memory_space<vmem>>) attributes {dimension_semantics = [#tpu.dimension_semantics<parallel>, #tpu.dimension_semantics<parallel>], iteration_bounds = array<i64: 1, 1>, scalar_prefetch = 0 : i64, scratch_operands = 0 : i64, tpu.core_type = #tpu.core_type<tc>, window_params = [{transform_indices = @transform_0, window_bounds = array<i64: 16, 32>}, {transform_indices = @transform_1, window_bounds = array<i64: 32, 96>}, {transform_indices = @transform_2, window_bounds = array<i64: 1, 96>}, {transform_indices = @transform_3, window_bounds = array<i64: 16, 96>}]} {
    %c0 = arith.constant 0 : index
    %c0_0 = arith.constant 0 : index
    %0 = vector.load %arg2[%c0, %c0_0] : memref<16x32xf32, #tpu.memory_space<vmem>>, vector<16x32xf32>
    %c0_1 = arith.constant 0 : index
    %c0_2 = arith.constant 0 : index
    %1 = vector.load %arg3[%c0_1, %c0_2] : memref<32x96xf32, #tpu.memory_space<vmem>>, vector<32x96xf32>
    %cst = arith.constant dense<0.000000e+00> : vector<16x96xf32>
    %2 = tpu.matmul %0, %1, %cst {dimension_numbers = #tpu.dot_dimension_numbers<[1], [0], [0], [1], [0, 0, 1, 1], [], []>} : vector<16x32xf32>, vector<32x96xf32>, vector<16x96xf32> -> vector<16x96xf32>
    %c0_3 = arith.constant 0 : index
    %c0_4 = arith.constant 0 : index
    %3 = vector.load %arg4[%c0_3, %c0_4] : memref<1x96xf32, #tpu.memory_space<vmem>>, vector<1x96xf32>
    %4 = vector.broadcast %3 : vector<1x96xf32> to vector<16x96xf32>
    %5 = arith.addf %2, %4 : vector<16x96xf32>
    %c0_5 = arith.constant 0 : index
    %c0_6 = arith.constant 0 : index
    %6 = vector.load %arg5[%c0_5, %c0_6] : memref<16x96xf32, #tpu.memory_space<vmem>>, vector<16x96xf32>
    tpu.vector_store %arg5[%c0_5, %c0_6], %5 {strides = array<i32>} : memref<16x96xf32, #tpu.memory_space<vmem>>, vector<16x96xf32>,
    return
  }
  func.func @transform_0(%arg0: i32, %arg1: i32) -> (i32, i32) {
    %c0_i32 = arith.constant 0 : i32
    %c0_i32_0 = arith.constant 0 : i32
    return %arg0, %c0_i32 : i32, i32
  }
  func.func @transform_1(%arg0: i32, %arg1: i32) -> (i32, i32) {
    %c0_i32 = arith.constant 0 : i32
    %c0_i32_0 = arith.constant 0 : i32
    return %c0_i32, %arg1 : i32, i32
  }
  func.func @transform_2(%arg0: i32, %arg1: i32) -> (i32, i32) {
    %c0_i32 = arith.constant 0 : i32
    %c0_i32_0 = arith.constant 0 : i32
    return %c0_i32, %arg1 : i32, i32
  }
  func.func @transform_3(%arg0: i32, %arg1: i32) -> (i32, i32) {
    %c0_i32 = arith.constant 0 : i32
    return %arg0, %arg1 : i32, i32
  }
}

</mosaic_0001>

<llo_original>
// kernel: tpu_custom_call.1
$region0: #{tpu_custom_call.1}
  #allocation0 [shape = 'u32[]', space=smem, size = 0x4, offset = 0x4, fixed_abs, tag = 'smem constant byte address 0x4 - core index']
  #allocation1 [shape = 'u32[72,128]{1,0:T(1,128)}', space=vmem, size = 0x9000, scoped, tag = 'internal scratch']
  %s0 = inlined_call_operand.hbm [shape: f32[16,32], index: 0, kind: input, shape index: {}]
  %s1 = inlined_call_operand.hbm [shape: f32[32,96], index: 1, kind: input, shape index: {}]
  %s2 = inlined_call_operand.vmem [shape: f32[1,96], index: 2, kind: input, shape index: {}]
  %s3 = inlined_call_operand.hbm [shape: f32[16,96], index: 3, kind: output, shape index: {}]
  %s4 = sld [smem:[#allocation0]]
  $region30: #{tpu_custom_call.1} parent=0
    _
  %s6 = ssub.s32 1, %s4
  %s7 = scalar_select 0, %s6, %s4
  $region1: #{tpu_custom_call.1} parent=0
    #allocation2 [shape = 'u8[8192]{0}', space=vmem, size = 0x2000, scoped, tag = 'input window, operand 0, single buffered']
    #allocation3 [shape = 's32[1]{0}', space=sflag, size = 0x4, scoped, tag = 'scoped memory for tpu_custom_call.1']
    #allocation4 [shape = 's32[1]{0}', space=sflag, size = 0x4, scoped, tag = 'scoped memory for tpu_custom_call.1']
    #allocation5 [shape = 'u8[16384]{0}', space=vmem, size = 0x4000, scoped, tag = 'input window, operand 1, single buffered']
    #allocation6 [shape = 's32[1]{0}', space=sflag, size = 0x4, scoped, tag = 'scoped memory for tpu_custom_call.1']
    #allocation7 [shape = 'u8[8192]{0}', space=vmem, size = 0x2000, scoped, tag = 'output window, operand 0, single buffered']
    %8 = vsyncpa [#allocation3], 0
    %9 = vsyncpa [#allocation6], 0
    %10 = vsyncpa [#allocation4], 0
    // Predicated region
    $region2: #{tpu_custom_call.1} parent=1 // pred_check
      _
    $region3: #{tpu_custom_call.1} parent=1 // pred_check_branch
      %12 = sbr.rel (0) target = $region5
    $region4: #{tpu_custom_call.1} parent=1 // pred_region
      %14 = vsyncadd [#allocation3], 0
      %s15 = sshll.u32 %s0, 4
      %s16 = int_to_ptr.hbm [resolvable:$true] %s15
      %s17 = sshll.u32 [#allocation2], 4
      %s18 = int_to_ptr.vmem [resolvable:$true] %s17
      %23 = dma.hbm_to_vmem [thread:$0]  %s16, 256, %s18, [#allocation3], 128, 128, 8
    $region5: #{tpu_custom_call.1} parent=1 // pred_fallthru
      _
    // Predicated region
    $region6: #{tpu_custom_call.1} parent=1 // pred_check
      _
    $region7: #{tpu_custom_call.1} parent=1 // pred_check_branch
      %25 = sbr.rel (0) target = $region9
    $region8: #{tpu_custom_call.1} parent=1 // pred_region
      %27 = vsyncadd [#allocation6], 0
      %s28 = sshll.u32 %s1, 4
      %s29 = int_to_ptr.hbm [resolvable:$true] %s28
      %s30 = sshll.u32 [#allocation5], 4
      %s31 = int_to_ptr.vmem [resolvable:$true] %s30
      %36 = dma.hbm_to_vmem [thread:$0]  %s29, 512, %s31, [#allocation6], 128, 128, 8
    $region9: #{tpu_custom_call.1} parent=1 // pred_fallthru
      _
    // Predicated region
    $region10: #{tpu_custom_call.1} parent=1 // pred_check
      _
    $region11: #{tpu_custom_call.1} parent=1 // pred_check_branch
      %38 = sbr.rel (0) target = $region13
    $region12: #{tpu_custom_call.1} parent=1 // pred_region
      _
    $region13: #{tpu_custom_call.1} parent=1 // pred_fallthru
      _
    // Predicated region
    $region14: #{tpu_custom_call.1} parent=1 // pred_check
      _
    $region15: #{tpu_custom_call.1} parent=1 // pred_check_branch
      %40 = sbr.rel (0) target = $region17
    $region16: #{tpu_custom_call.1} parent=1 // pred_region
      %42 = dma.done [#allocation3], 256
    $region17: #{tpu_custom_call.1} parent=1 // pred_fallthru
      _
    // Predicated region
    $region18: #{tpu_custom_call.1} parent=1 // pred_check
      _
    $region19: #{tpu_custom_call.1} parent=1 // pred_check_branch
      %44 = sbr.rel (0) target = $region21
    $region20: #{tpu_custom_call.1} parent=1 // pred_region
      %46 = dma.done [#allocation6], 512
    $region21: #{tpu_custom_call.1} parent=1 // pred_fallthru
      _
    %v47 = vld [vmem:[#allocation2] sm:$0xff]
    %v48 = vld [vmem:[#allocation2 + $0x8] sm:$0xff]
    %v49 = vld [vmem:[#allocation5] sm:$0xff]
    %v50 = vld [vmem:[#allocation5 + $0x8] sm:$0xff]
    %v51 = vld [vmem:[#allocation5 + $0x10] sm:$0xff]
    %v52 = vld [vmem:[#allocation5 + $0x18] sm:$0xff]
    %v53 = vld [vmem:[%s2] sm:$0x1]
    %v55 = vperm.slane %v53, 0
    %vm57 = vcmask 261120
    %v59 = vsel %vm57, %v47, 0
    %v62 = vsel %vm57, %v48, 0
    %64 = vmatpush.msra.mxu0 0.0
    %65 = vmatpush.msra.mxu0 0.0
    %66 = vmatpush.msra.mxu0 0.0
    %67 = vmatpush.msra.mxu0 0.0
    %68 = vmatpush.msra.mxu0 0.0
    %69 = vmatpush.msra.mxu0 0.0
    %70 = vmatpush.msra.mxu0 0.0
    %71 = vmatpush.msra.mxu0 0.0
    %72 = vmatpush.msra.mxu0 0.0
    %73 = vmatpush.msra.mxu0 0.0
    %74 = vmatpush.msra.mxu0 0.0
    %75 = vmatpush.msra.mxu0 0.0
    %76 = vmatpush.msra.mxu0 %v52
    %77 = vmatpush.msra.mxu0 %v51
    %78 = vmatpush.msra.mxu0 %v50
    %79 = vmatpush.msra.mxu0 %v49
    %80 = vmatmul.f32.gmra.mxu0 %v59
    %v81 = vpop.f32.mrf.mxu0
    %v82 = vadd.f32 %v55, %v81
    %83 = vmatmul.f32.gmra.mxu0 %v62
    %v84 = vpop.f32.mrf.mxu0
    %v85 = vadd.f32 %v55, %v84
    %86 = vdwg.mxu0
    %vm87 = vcmask 785408
    %88 = vst.msk [vmem:[#allocation7] sm:$0xff] %vm87, %v82
    %89 = vst.msk [vmem:[#allocation7 + $0x8] sm:$0xff] %vm87, %v85
    // Predicated region
    $region22: #{tpu_custom_call.1} parent=1 // pred_check
      _
    $region23: #{tpu_custom_call.1} parent=1 // pred_check_branch
      %91 = sbr.rel (0) target = $region25
    $region24: #{tpu_custom_call.1} parent=1 // pred_region
      %93 = vsyncadd [#allocation4], 0
      %s94 = sshll.u32 [#allocation7], 4
      %s95 = int_to_ptr.vmem [resolvable:$true] %s94
      %s96 = sshll.u32 %s3, 4
      %s97 = int_to_ptr.hbm [resolvable:$true] %s96
      %102 = dma.vmem_to_hbm [thread:$0]  %s95, 256, %s97, [#allocation4], 128, 128, 8
    $region25: #{tpu_custom_call.1} parent=1 // pred_fallthru
      _
    // Predicated region
    $region26: #{tpu_custom_call.1} parent=1 // pred_check
      _
    $region27: #{tpu_custom_call.1} parent=1 // pred_check_branch
      %104 = sbr.rel (0) target = $region29
    $region28: #{tpu_custom_call.1} parent=1 // pred_region
      %106 = dma.done [#allocation4], 256
    $region29: #{tpu_custom_call.1} parent=1 // pred_fallthru
      _
    %107 = vsyncpa [#allocation3], 1
    %108 = vsyncpa [#allocation6], 1
    %109 = vsyncpa [#allocation4], 1

</llo_original>
